<compile_context>
chip_gen: v7x
topology: tpu7x:2x2x1
jax: 0.10.0
libtpu: 0.0.40
codegen_flags: <defaults>
</compile_context>

<pallas_src>
import functools

import jax
import jax.numpy as jnp
from jax.experimental import pallas as pl
from jax.experimental.pallas import tpu as pltpu

KSIZE = 3  # ConvolutionalBlock uses kernel_size=3, padding=1 (reflect)


def _round_up(x, m):
    return ((x + m - 1) // m) * m


# ----------------------------------------------------------------------------
# Pallas kernel: per-sample (im2col-matmul + bias + instance-norm + activation)
# ----------------------------------------------------------------------------
def _conv_block_kernel(p_ref, w_ref, b_ref, o_ref, *, use_act):
    x = p_ref[...]                   # (HW, Kp)    bf16 patches of one sample
    w = w_ref[...]                   # (Kp, Coutp) bf16
    # MXU matmul: bf16 operands, f32 accumulate; epilogue in f32.
    y = jnp.dot(x, w, preferred_element_type=jnp.float32) + b_ref[...]

    # InstanceNorm2d(affine=False): per-sample, per-channel over spatial rows.
    mean = jnp.mean(y, axis=0, keepdims=True)
    var = jnp.mean(jnp.square(y - mean), axis=0, keepdims=True)   # biased var
    y = (y - mean) * jax.lax.rsqrt(var + 1e-5)

    if use_act:
        y = jnp.maximum(y, 0.0)      # ReLU (use_act=False -> Identity)

    o_ref[...] = y.astype(o_ref.dtype)


def _conv_block_pallas(patches, w_mat, bias, *, use_act):
    """patches: (N, HW, Kp) bf16; w_mat: (Kp, Coutp) bf16; bias: (1, Coutp) f32."""
    N, HW, Kp = patches.shape
    Coutp = w_mat.shape[1]
    kernel = functools.partial(_conv_block_kernel, use_act=use_act)
    return pl.pallas_call(
        kernel,
        out_shape=jax.ShapeDtypeStruct((N, HW, Coutp), jnp.float32),
        grid_spec=pltpu.PrefetchScalarGridSpec(
            num_scalar_prefetch=0,
            grid=(N,),
            in_specs=[
                # None squeezes the size-1 batch dim out of the kernel ref
                # (clean 2-D tiles, no degenerate major dim).
                pl.BlockSpec((None, HW, Kp), lambda n: (n, 0, 0)),
                # Grid-invariant weight / bias blocks.
                pl.BlockSpec((Kp, Coutp), lambda n: (0, 0)),
                pl.BlockSpec((1, Coutp), lambda n: (0, 0)),
            ],
            out_specs=pl.BlockSpec((None, HW, Coutp), lambda n: (n, 0, 0)),
        ),
        compiler_params=pltpu.CompilerParams(
            # Batch samples are independent -> "parallel" lets v7x split the
            # grid across both TensorCores; neutral on v5e/v6e.
            dimension_semantics=("parallel",)),
    )(patches, w_mat, bias)


# ----------------------------------------------------------------------------
# JAX glue: reflect pad + im2col (layout plumbing only, done in bf16)
# ----------------------------------------------------------------------------
def _im2col_reflect(x_nhwc, stride):
    """x_nhwc: (N, H, W, C) -> patches (N, Ho*Wo, KSIZE*KSIZE*C), plus Ho, Wo."""
    xp = jnp.pad(x_nhwc, ((0, 0), (1, 1), (1, 1), (0, 0)), mode="reflect")
    N, Hp, Wp, C = xp.shape
    Ho = (Hp - KSIZE) // stride + 1
    Wo = (Wp - KSIZE) // stride + 1
    cols = []
    for di in range(KSIZE):
        for dj in range(KSIZE):
            cols.append(
                xp[:, di:di + (Ho - 1) * stride + 1:stride,
                      dj:dj + (Wo - 1) * stride + 1:stride, :])
    p = jnp.stack(cols, axis=3)                    # (N, Ho, Wo, k*k, C)
    p = p.reshape(N, Ho * Wo, KSIZE * KSIZE * C)   # K ordering: (kh, kw, cin)
    return p, Ho, Wo


def conv_block_forward(x_nchw, w_oihw, bias, *, stride=2, down=True, use_act=True):
    """Forward of ConvolutionalBlock: Conv2d(k=3, reflect pad=1) + IN + ReLU."""
    if not down:
        # TODO(synk): ConvTranspose2d (down=False) branch not implemented in Pallas.
        raise NotImplementedError("down=False (ConvTranspose2d) branch not implemented")

    Cout, Cin = w_oihw.shape[0], w_oihw.shape[1]
    x = jnp.transpose(x_nchw, (0, 2, 3, 1)).astype(jnp.bfloat16)   # NCHW -> NHWC bf16
    patches, Ho, Wo = _im2col_reflect(x, stride)
    N, HW, K = patches.shape

    # Lane-align contraction (K) and output-channel dims for the MXU / stores.
    Kp = _round_up(K, 128)
    Coutp = _round_up(Cout, 128)

    patches = jnp.pad(patches, ((0, 0), (0, 0), (0, Kp - K)))
    # PyTorch weight (Cout, Cin, kh, kw) -> (kh*kw*Cin, Cout), matching patch K order.
    w_mat = jnp.transpose(w_oihw, (2, 3, 1, 0)).reshape(K, Cout).astype(jnp.bfloat16)
    w_mat = jnp.pad(w_mat, ((0, Kp - K), (0, Coutp - Cout)))
    b_pad = jnp.pad(bias.astype(jnp.float32).reshape(1, Cout),
                    ((0, 0), (0, Coutp - Cout)))

    y = _conv_block_pallas(patches, w_mat, b_pad, use_act=use_act)  # (N, HW, Coutp)
    y = y[:, :, :Cout].reshape(N, Ho, Wo, Cout)
    return jnp.transpose(y, (0, 3, 1, 2))          # back to NCHW


# ----------------------------------------------------------------------------
# Pure-JAX reference (for correctness check of the Pallas path)
# ----------------------------------------------------------------------------
def reference_forward(x_nchw, w_oihw, bias, *, stride=2, use_act=True):
    xp = jnp.pad(x_nchw, ((0, 0), (0, 0), (1, 1), (1, 1)), mode="reflect")
    y = jax.lax.conv_general_dilated(
        xp, w_oihw, (stride, stride), "VALID",
        dimension_numbers=("NCHW", "OIHW", "NCHW"))
    y = y + bias.reshape(1, -1, 1, 1)
    mean = jnp.mean(y, axis=(2, 3), keepdims=True)
    var = jnp.mean(jnp.square(y - mean), axis=(2, 3), keepdims=True)
    y = (y - mean) * jax.lax.rsqrt(var + 1e-5)
    if use_act:
        y = jnp.maximum(y, 0.0)
    return y


if __name__ == "__main__":
    key = jax.random.PRNGKey(0)
    kx, kw, kb = jax.random.split(key, 3)
    N, Cin, H, W = 2, 4, 16, 16
    Cout = 64
    x = jax.random.normal(kx, (N, Cin, H, W), jnp.float32)
    w = jax.random.normal(kw, (Cout, Cin, KSIZE, KSIZE), jnp.float32) * 0.1
    b = jax.random.normal(kb, (Cout,), jnp.float32) * 0.1

    # Default block (stride=2, ReLU) and a stride-1 / Identity-activation variant.
    for stride, use_act in ((2, True), (1, False)):
        run = jax.jit(functools.partial(conv_block_forward,
                                        stride=stride, use_act=use_act))
        ref_fn = jax.jit(functools.partial(reference_forward,
                                           stride=stride, use_act=use_act))
        out = jax.block_until_ready(run(x, w, b))
        ref = jax.block_until_ready(ref_fn(x, w, b))
        assert out.shape == ref.shape, (out.shape, ref.shape)
        err = float(jnp.max(jnp.abs(out - ref)))
        # bf16 MXU operands (f32 accumulate) -> loosened tolerance vs f32 reference.
        assert bool(jnp.allclose(out, ref, rtol=3e-2, atol=3e-2)), (
            f"stride={stride} use_act={use_act} max err {err}")

    print("KERNEL_OK")
</pallas_src>

<mosaic_0001>
module attributes {stable_mosaic.version = 11 : i64} {
  func.func @_conv_block_kernel(%arg0: i32, %arg1: memref<1x64x128xbf16, #tpu.memory_space<vmem>>, %arg2: memref<128x128xbf16, #tpu.memory_space<vmem>>, %arg3: memref<1x128xf32, #tpu.memory_space<vmem>>, %arg4: memref<1x64x128xf32, #tpu.memory_space<vmem>>) attributes {dimension_semantics = [#tpu.dimension_semantics<parallel>], iteration_bounds = array<i64: 2>, scalar_prefetch = 0 : i64, scratch_operands = 0 : i64, tpu.core_type = #tpu.core_type<tc>, window_params = [{transform_indices = @transform_0, window_bounds = array<i64: 1, 64, 128>}, {pipeline_mode = #tpu.pipeline_mode<synchronous>, transform_indices = @transform_1, window_bounds = array<i64: 128, 128>}, {pipeline_mode = #tpu.pipeline_mode<synchronous>, transform_indices = @transform_2, window_bounds = array<i64: 1, 128>}, {transform_indices = @transform_3, window_bounds = array<i64: 1, 64, 128>}]} {
    %c0 = arith.constant 0 : index
    %c0_0 = arith.constant 0 : index
    %c0_1 = arith.constant 0 : index
    %0 = vector.load %arg1[%c0, %c0_0, %c0_1] : memref<1x64x128xbf16, #tpu.memory_space<vmem>>, vector<1x64x128xbf16>
    %1 = vector.shape_cast %0 : vector<1x64x128xbf16> to vector<64x128xbf16>
    %c0_2 = arith.constant 0 : index
    %c0_3 = arith.constant 0 : index
    %2 = vector.load %arg2[%c0_2, %c0_3] : memref<128x128xbf16, #tpu.memory_space<vmem>>, vector<128x128xbf16>
    %cst = arith.constant dense<0.000000e+00> : vector<64x128xf32>
    %3 = tpu.matmul %1, %2, %cst {dimension_numbers = #tpu.dot_dimension_numbers<[1], [0], [0], [1], [0, 0, 1, 1], [], []>} : vector<64x128xbf16>, vector<128x128xbf16>, vector<64x128xf32> -> vector<64x128xf32>
    %c0_4 = arith.constant 0 : index
    %c0_5 = arith.constant 0 : index
    %4 = vector.load %arg3[%c0_4, %c0_5] : memref<1x128xf32, #tpu.memory_space<vmem>>, vector<1x128xf32>
    %5 = vector.broadcast %4 : vector<1x128xf32> to vector<64x128xf32>
    %6 = arith.addf %3, %5 : vector<64x128xf32>
    %cst_6 = arith.constant dense<0.000000e+00> : vector<128xf32>
    %7 = vector.multi_reduction <add>, %6, %cst_6 [0] : vector<64x128xf32> to vector<128xf32>
    %8 = vector.shape_cast %7 : vector<128xf32> to vector<1x128xf32>
    %cst_7 = arith.constant 6.400000e+01 : f32
    %9 = vector.broadcast %cst_7 : f32 to vector<1x128xf32>
    %10 = arith.divf %8, %9 : vector<1x128xf32>
    %11 = vector.broadcast %10 : vector<1x128xf32> to vector<64x128xf32>
    %12 = arith.subf %6, %11 : vector<64x128xf32>
    %13 = arith.mulf %12, %12 : vector<64x128xf32>
    %cst_8 = arith.constant dense<0.000000e+00> : vector<128xf32>
    %14 = vector.multi_reduction <add>, %13, %cst_8 [0] : vector<64x128xf32> to vector<128xf32>
    %15 = vector.shape_cast %14 : vector<128xf32> to vector<1x128xf32>
    %cst_9 = arith.constant 6.400000e+01 : f32
    %16 = vector.broadcast %cst_9 : f32 to vector<1x128xf32>
    %17 = arith.divf %15, %16 : vector<1x128xf32>
    %18 = vector.broadcast %10 : vector<1x128xf32> to vector<64x128xf32>
    %19 = arith.subf %6, %18 : vector<64x128xf32>
    %cst_10 = arith.constant 9.99999974E-6 : f32
    %20 = vector.broadcast %cst_10 : f32 to vector<1x128xf32>
    %21 = arith.addf %17, %20 : vector<1x128xf32>
    %22 = math.rsqrt %21 : vector<1x128xf32>
    %23 = vector.broadcast %22 : vector<1x128xf32> to vector<64x128xf32>
    %24 = arith.mulf %19, %23 : vector<64x128xf32>
    %cst_11 = arith.constant 0.000000e+00 : f32
    %25 = vector.broadcast %cst_11 : f32 to vector<64x128xf32>
    %26 = arith.maximumf %24, %25 : vector<64x128xf32>
    %c0_12 = arith.constant 0 : index
    %c0_13 = arith.constant 0 : index
    %c0_14 = arith.constant 0 : index
    %27 = vector.load %arg4[%c0_12, %c0_13, %c0_14] : memref<1x64x128xf32, #tpu.memory_space<vmem>>, vector<1x64x128xf32>
    %28 = vector.shape_cast %27 : vector<1x64x128xf32> to vector<64x128xf32>
    %29 = vector.shape_cast %26 : vector<64x128xf32> to vector<1x64x128xf32>
    tpu.vector_store %arg4[%c0_12, %c0_13, %c0_14], %29 {strides = array<i32>} : memref<1x64x128xf32, #tpu.memory_space<vmem>>, vector<1x64x128xf32>,
    return
  }
  func.func @transform_0(%arg0: i32) -> (i32, i32, i32) {
    %c0_i32 = arith.constant 0 : i32
    %c0_i32_0 = arith.constant 0 : i32
    %c0_i32_1 = arith.constant 0 : i32
    return %arg0, %c0_i32, %c0_i32_0 : i32, i32, i32
  }
  func.func @transform_1(%arg0: i32) -> (i32, i32) {
    %c0_i32 = arith.constant 0 : i32
    %c0_i32_0 = arith.constant 0 : i32
    %c0_i32_1 = arith.constant 0 : i32
    return %c0_i32, %c0_i32_0 : i32, i32
  }
  func.func @transform_2(%arg0: i32) -> (i32, i32) {
    %c0_i32 = arith.constant 0 : i32
    %c0_i32_0 = arith.constant 0 : i32
    %c0_i32_1 = arith.constant 0 : i32
    return %c0_i32, %c0_i32_0 : i32, i32
  }
  func.func @transform_3(%arg0: i32) -> (i32, i32, i32) {
    %c0_i32 = arith.constant 0 : i32
    %c0_i32_0 = arith.constant 0 : i32
    %c0_i32_1 = arith.constant 0 : i32
    return %arg0, %c0_i32, %c0_i32_0 : i32, i32, i32
  }
}

</mosaic_0001>

<llo_original>
// kernel: conv_block_forward.1
$region0: #{conv_block_forward.1}
  #allocation0 [shape = 'u32[]', space=smem, size = 0x4, offset = 0x4, fixed_abs, tag = 'smem constant byte address 0x4 - core index']
  #allocation1 [shape = 'u32[144,128]{1,0:T(1,128)}', space=vmem, size = 0x12000, scoped, tag = 'internal scratch']
  %s0 = inlined_call_operand.vmem [shape: bf16[2,64,128], index: 0, kind: input, shape index: {}]
  %s1 = inlined_call_operand.vmem [shape: bf16[128,128], index: 1, kind: input, shape index: {}]
  %s2 = inlined_call_operand.vmem [shape: f32[1,128], index: 2, kind: input, shape index: {}]
  %s3 = inlined_call_operand.vmem [shape: f32[2,64,128], index: 3, kind: output, shape index: {}]
  %s4 = sld [smem:[#allocation0]]
  $region45: #{conv_block_forward.1} parent=0
    _
  %s6 = ssub.s32 1, %s4
  %s7 = scalar_select 0, %s6, %s4
  loop: start=0, step=1, limit=4
  $region2: #{conv_block_forward.1} parent=0 // loop_pre_header
    _
  $region3: #{conv_block_forward.1} parent=0 // loop_header
    %s9 = sphi 0, %s13
    %p10 = scmp.ge.s32.totalorder %s9, 4
    %s19 = sphi 0, %s21
    %s22 = sphi 0, %s19
    %s23 = sphi 0, %s22
    %s39 = sphi 0, %s23
    %s43 = sphi 0, %s43
    %s45 = sphi 0, %s43
    %s46 = sphi 0, %s45
    %s60 = sphi 0, %s46
    %s64 = sphi 0, %s64
    %s66 = sphi 0, %s64
    %s67 = sphi 0, %s66
    %s81 = sphi 0, %s67
    %s87 = sphi 0, %s89
    %s90 = sphi 0, %s87
    %s91 = sphi 0, %s90
    %s107 = sphi 0, %s91
  $region4: #{conv_block_forward.1} parent=0 // loop_header_branch
    %12 = sbr.rel (%p10) target = $region8
  $region5: #{conv_block_forward.1} parent=0 // loop_body
    %s14 = ssub.s32 %s9, 1
    %s15 = ssub.s32 %s9, 2
    %s16 = sadd.s32 %s9, 1
    %s17 = ssub.s32 %s9, %s16
    %p18 = scmp.eq.s32.totalorder %s17, 0
    %s20 = sadd.s32 %s19, 1
    %s21 = scalar_select %p18, %s19, %s20
    %p24 = pneg %p18
    %p25 = scmp.eq.s32.totalorder %s9, 1
    %p26 = por %p24, %p25
    %p27 = scmp.ne.s32.totalorder %s19, %s22
    %p28 = scmp.eq.s32.totalorder %s9, 0
    %p29 = por %p27, %p28
    %p30 = scmp.ne.s32.totalorder %s19, %s22
    %p31 = scmp.eq.s32.totalorder %s14, 1
    %p32 = por %p30, %p31
    %p33 = scmp.ne.s32.totalorder %s22, %s23
    %p34 = scmp.eq.s32.totalorder %s14, 0
    %p35 = por %p33, %p34
    %p36 = scmp.ne.s32.totalorder %s22, %s23
    %p37 = scmp.eq.s32.totalorder %s15, 1
    %p38 = por %p36, %p37
    %p40 = scmp.ne.s32.totalorder %s23, %s39
    %p41 = scmp.eq.s32.totalorder %s15, 0
    %p42 = por %p40, %p41
    %s44 = sadd.s32 %s43, 1
    %p47 = scmp.eq.s32.totalorder %s9, 1
    %p48 = scmp.ne.s32.totalorder %s43, %s45
    %p49 = scmp.eq.s32.totalorder %s9, 0
    %p50 = por %p48, %p49
    %p51 = scmp.ne.s32.totalorder %s43, %s45
    %p52 = scmp.eq.s32.totalorder %s14, 1
    %p53 = por %p51, %p52
    %p54 = scmp.ne.s32.totalorder %s45, %s46
    %p55 = scmp.eq.s32.totalorder %s14, 0
    %p56 = por %p54, %p55
    %p57 = scmp.ne.s32.totalorder %s45, %s46
    %p58 = scmp.eq.s32.totalorder %s15, 1
    %p59 = por %p57, %p58
    %p61 = scmp.ne.s32.totalorder %s46, %s60
    %p62 = scmp.eq.s32.totalorder %s15, 0
    %p63 = por %p61, %p62
    %s65 = sadd.s32 %s64, 1
    %p68 = scmp.eq.s32.totalorder %s9, 1
    %p69 = scmp.ne.s32.totalorder %s64, %s66
    %p70 = scmp.eq.s32.totalorder %s9, 0
    %p71 = por %p69, %p70
    %p72 = scmp.ne.s32.totalorder %s64, %s66
    %p73 = scmp.eq.s32.totalorder %s14, 1
    %p74 = por %p72, %p73
    %p75 = scmp.ne.s32.totalorder %s66, %s67
    %p76 = scmp.eq.s32.totalorder %s14, 0
    %p77 = por %p75, %p76
    %p78 = scmp.ne.s32.totalorder %s66, %s67
    %p79 = scmp.eq.s32.totalorder %s15, 1
    %p80 = por %p78, %p79
    %p82 = scmp.ne.s32.totalorder %s67, %s81
    %p83 = scmp.eq.s32.totalorder %s15, 0
    %p84 = por %p82, %p83
    %s85 = ssub.s32 %s9, %s16
    %p86 = scmp.eq.s32.totalorder %s85, 0
    %s88 = sadd.s32 %s87, 1
    %s89 = scalar_select %p86, %s87, %s88
    %p92 = pneg %p86
    %p93 = scmp.eq.s32.totalorder %s9, 1
    %p94 = por %p92, %p93
    %p95 = scmp.ne.s32.totalorder %s87, %s90
    %p96 = scmp.eq.s32.totalorder %s9, 0
    %p97 = por %p95, %p96
    %p98 = scmp.ne.s32.totalorder %s87, %s90
    %p99 = scmp.eq.s32.totalorder %s14, 1
    %p100 = por %p98, %p99
    %p101 = scmp.ne.s32.totalorder %s90, %s91
    %p102 = scmp.eq.s32.totalorder %s14, 0
    %p103 = por %p101, %p102
    %p104 = scmp.ne.s32.totalorder %s90, %s91
    %p105 = scmp.eq.s32.totalorder %s15, 1
    %p106 = por %p104, %p105
    %p108 = scmp.ne.s32.totalorder %s91, %s107
    %p109 = scmp.eq.s32.totalorder %s15, 0
    %p110 = por %p108, %p109
    %p111 = scmp.le.s32.totalorder 1, %s9
    %p112 = scmp.lt.s32.totalorder %s9, 3
    %p113 = pnand %p111, %p112
    %p114 = pneg %p113
    // Predicated region
    $region9: #{conv_block_forward.1} parent=5 // pred_check
      _
    $region10: #{conv_block_forward.1} parent=5 // pred_check_branch
      %116 = sbr.rel (%p113) target = $region12
    $region11: #{conv_block_forward.1} parent=5 // pred_region
      %s117 = ssub.s32 %s9, 1
      // Predicated region
      $region13: #{conv_block_forward.1} parent=11 // pred_check
        %p118 = pneg %p56
      $region14: #{conv_block_forward.1} parent=11 // pred_check_branch
        %120 = sbr.rel (%p118) target = $region16
      $region15: #{conv_block_forward.1} parent=11 // pred_region
        _
      $region16: #{conv_block_forward.1} parent=11 // pred_fallthru
        _
      // Predicated region
      $region17: #{conv_block_forward.1} parent=11 // pred_check
        %p121 = pneg %p77
      $region18: #{conv_block_forward.1} parent=11 // pred_check_branch
        %123 = sbr.rel (%p121) target = $region20
      $region19: #{conv_block_forward.1} parent=11 // pred_region
        _
      $region20: #{conv_block_forward.1} parent=11 // pred_fallthru
        _
    $region12: #{conv_block_forward.1} parent=5 // pred_fallthru
      _
    %p124 = scmp.lt.s32.totalorder %s9, 2
    // Predicated region
    $region21: #{conv_block_forward.1} parent=5 // pred_check
      %p125 = pneg %p124
    $region22: #{conv_block_forward.1} parent=5 // pred_check_branch
      %127 = sbr.rel (%p125) target = $region24
    $region23: #{conv_block_forward.1} parent=5 // pred_region
      // Predicated region
      $region25: #{conv_block_forward.1} parent=23 // pred_check
        %p128 = pneg %p29
      $region26: #{conv_block_forward.1} parent=23 // pred_check_branch
        %130 = sbr.rel (%p128) target = $region28
      $region27: #{conv_block_forward.1} parent=23 // pred_region
        %p131 = scmp.lt.s32.totalorder %s9, 1
        %s132 = scalar_select %p131, %s9, 1
        %s133 = smul.addr %s132, 8
        %s134 = smul.addr %s133, 4
        %s135 = scalar_lea.vmem %s0, %s134
      $region28: #{conv_block_forward.1} parent=23 // pred_fallthru
        _
    $region24: #{conv_block_forward.1} parent=5 // pred_fallthru
      _
    %p136 = scmp.le.s32.totalorder 1, %s9
    %p137 = scmp.lt.s32.totalorder %s9, 3
    %p138 = pnand %p136, %p137
    %p139 = pneg %p138
    // Predicated region
    $region29: #{conv_block_forward.1} parent=5 // pred_check
      _
    $region30: #{conv_block_forward.1} parent=5 // pred_check_branch
      %141 = sbr.rel (%p138) target = $region32
    $region31: #{conv_block_forward.1} parent=5 // pred_region
      %s142 = ssub.s32 %s9, 1
      %p143 = scmp.lt.s32.totalorder %s14, 1
      %s144 = scalar_select %p143, %s14, 1
      %s145 = smul.addr %s144, 8
      %s146 = smul.addr %s145, 4
      %s147 = scalar_lea.vmem %s0, %s146
      %p148 = pneg %p35
      %p149 = pneg %p32
      %p150 = pneg %p56
      %p151 = pneg %p53
      %p152 = pneg %p77
      %p153 = pneg %p74
      %p154 = pneg %p103
      %p155 = pneg %p100
      %p156 = scmp.lt.s32.totalorder %s14, 1
      %s157 = scalar_select %p156, %s14, 1
      %s158 = smul.addr %s157, 8
      %s159 = smul.addr %s158, 8
      %s160 = scalar_lea.vmem %s3, %s159
      %p161 = scmp.lt.s32.totalorder %s14, 1
      %s162 = scalar_select %p161, %s14, 1
      %s163 = smul.addr %s162, 8
      %s164 = smul.addr %s163, 4
      %s165 = scalar_lea.vmem %s0, %s164
      %p166 = scmp.lt.s32.totalorder %s14, 1
      %s167 = scalar_select %p166, %s14, 1
      %s168 = smul.addr %s167, 8
      %s169 = smul.addr %s168, 8
      %s170 = scalar_lea.vmem %s3, %s169
      %v172 = vld [vmem:[%s165] sm:$0xf]
      %v173 = vld [vmem:[%s165 + $0x4] sm:$0xf]
      %v174 = vld [vmem:[%s165 + $0x8] sm:$0xf]
      %v175 = vld [vmem:[%s165 + $0xc] sm:$0xf]
      %v176 = vld [vmem:[%s165 + $0x10] sm:$0xf]
      %v177 = vld [vmem:[%s165 + $0x14] sm:$0xf]
      %v178 = vld [vmem:[%s165 + $0x18] sm:$0xf]
      %v179 = vld [vmem:[%s165 + $0x1c] sm:$0xf]
      %v180 = vld [vmem:[%s1] sm:$0xf]
      %v181 = vld [vmem:[%s1 + $0x4] sm:$0xf]
      %v182 = vld [vmem:[%s1 + $0x8] sm:$0xf]
      %v183 = vld [vmem:[%s1 + $0xc] sm:$0xf]
      %v184 = vld [vmem:[%s1 + $0x10] sm:$0xf]
      %v185 = vld [vmem:[%s1 + $0x14] sm:$0xf]
      %v186 = vld [vmem:[%s1 + $0x18] sm:$0xf]
      %v187 = vld [vmem:[%s1 + $0x1c] sm:$0xf]
      %v188 = vld [vmem:[%s1 + $0x20] sm:$0xf]
      %v189 = vld [vmem:[%s1 + $0x24] sm:$0xf]
      %v190 = vld [vmem:[%s1 + $0x28] sm:$0xf]
      %v191 = vld [vmem:[%s1 + $0x2c] sm:$0xf]
      %v192 = vld [vmem:[%s1 + $0x30] sm:$0xf]
      %v193 = vld [vmem:[%s1 + $0x34] sm:$0xf]
      %v194 = vld [vmem:[%s1 + $0x38] sm:$0xf]
      %v195 = vld [vmem:[%s1 + $0x3c] sm:$0xf]
      %v196 = vld [vmem:[%s2] sm:$0x1]
      %v198 = vlaneseq
      %v199 = vshrl.u32 %v198, 7
      %v200 = vsub.s32 0, %v199
      %v201 = vrot.slane %v196, %v200
      %v211 = vunpack.c.l.b16 %v172
      %v212 = vunpack.c.l.b16 %v173
      %v213 = vunpack.c.l.b16 %v174
      %v214 = vunpack.c.l.b16 %v175
      %v215 = vunpack.c.l.b16 %v176
      %v216 = vunpack.c.l.b16 %v177
      %v217 = vunpack.c.l.b16 %v178
      %v218 = vunpack.c.l.b16 %v179
      %v219 = vpack.c.b16 %v212, %v211
      %v220 = vpack.c.b16 %v214, %v213
      %v221 = vpack.c.b16 %v216, %v215
      %v222 = vpack.c.b16 %v218, %v217
      %v243 = vunpack.c.l.b16 %v180
      %v244 = vunpack.c.l.b16 %v181
      %v245 = vunpack.c.l.b16 %v182
      %v246 = vunpack.c.l.b16 %v183
      %v247 = vunpack.c.l.b16 %v184
      %v248 = vunpack.c.l.b16 %v185
      %v249 = vunpack.c.l.b16 %v186
      %v250 = vunpack.c.l.b16 %v187
      %v251 = vunpack.c.l.b16 %v188
      %v252 = vunpack.c.l.b16 %v189
      %v253 = vunpack.c.l.b16 %v190
      %v254 = vunpack.c.l.b16 %v191
      %v255 = vunpack.c.l.b16 %v192
      %v256 = vunpack.c.l.b16 %v193
      %v257 = vunpack.c.l.b16 %v194
      %v258 = vunpack.c.l.b16 %v195
      %v259 = vpack.c.b16 %v244, %v243
      %v260 = vpack.c.b16 %v246, %v245
      %v261 = vpack.c.b16 %v248, %v247
      %v262 = vpack.c.b16 %v250, %v249
      %v263 = vpack.c.b16 %v252, %v251
      %v264 = vpack.c.b16 %v254, %v253
      %v265 = vpack.c.b16 %v256, %v255
      %v266 = vpack.c.b16 %v258, %v257
      %275 = vmatprep.subr.bf16.mxu0 0
      %276 = vmatpush1.bf16.msra.mxu0 %v259
      %277 = vmatprep.subr.bf16.mxu0 0
      %278 = vmatpush1.bf16.msra.mxu0 %v260
      %279 = vmatprep.subr.bf16.mxu0 0
      %280 = vmatpush1.bf16.msra.mxu0 %v261
      %281 = vmatprep.subr.bf16.mxu0 0
      %282 = vmatpush1.bf16.msra.mxu0 %v262
      %283 = vmatprep.subr.bf16.mxu0 0
      %284 = vmatpush1.bf16.msra.mxu0 %v263
      %285 = vmatprep.subr.bf16.mxu0 0
      %286 = vmatpush1.bf16.msra.mxu0 %v264
      %287 = vmatprep.subr.bf16.mxu0 0
      %288 = vmatpush1.bf16.msra.mxu0 %v265
      %289 = vmatprep.subr.bf16.mxu0 0
      %290 = vmatpush1.bf16.msra.mxu0 %v266
      %291 = vmatprep.subr.bf16.mxu0 0
      %292 = vmatpush1.bf16.msra.mxu0 0
      %293 = vmatprep.subr.bf16.mxu0 0
      %294 = vmatpush1.bf16.msra.mxu0 0
      %295 = vmatprep.subr.bf16.mxu0 0
      %296 = vmatpush1.bf16.msra.mxu0 0
      %297 = vmatprep.subr.bf16.mxu0 0
      %298 = vmatpush1.bf16.msra.mxu0 0
      %299 = vmatprep.subr.bf16.mxu0 0
      %300 = vmatpush1.bf16.msra.mxu0 0
      %301 = vmatprep.subr.bf16.mxu0 0
      %302 = vmatpush1.bf16.msra.mxu0 0
      %303 = vmatprep.subr.bf16.mxu0 0
      %304 = vmatpush1.bf16.msra.mxu0 0
      %305 = vmatprep.subr.bf16.mxu0 0
      %306 = vmatpush1.bf16.msra.mxu0 0
      %307 = vmatprep.mubr.bf16.mxu0 0
      %308 = vmatmul.mubr.bf16.gmra.mrb[0].mxu0 %v219
      %v309 = vpop.f32.mrb[0].mxu0
      %v310 = vadd.f32 %v201, %v309
      %v311 = vpop.f32.mrb[0].mxu0
      %v312 = vpop.f32.mrb[0].mxu0
      %v313 = vadd.f32 %v201, %v312
      %v314 = vpop.f32.mrb[0].mxu0
      %315 = vmatprep.mubr.bf16.mxu0 0
      %316 = vmatmul.mubr.bf16.gmra.mrb[0].mxu0 %v220
      %v317 = vpop.f32.mrb[0].mxu0
      %v318 = vadd.f32 %v201, %v317
      %v319 = vpop.f32.mrb[0].mxu0
      %v320 = vpop.f32.mrb[0].mxu0
      %v321 = vadd.f32 %v201, %v320
      %v322 = vpop.f32.mrb[0].mxu0
      %323 = vmatprep.mubr.bf16.mxu0 0
      %324 = vmatmul.mubr.bf16.gmra.mrb[0].mxu0 %v221
      %v325 = vpop.f32.mrb[0].mxu0
      %v326 = vadd.f32 %v201, %v325
      %v327 = vpop.f32.mrb[0].mxu0
      %v328 = vpop.f32.mrb[0].mxu0
      %v329 = vadd.f32 %v201, %v328
      %v330 = vpop.f32.mrb[0].mxu0
      %331 = vmatprep.mubr.bf16.mxu0 0
      %332 = vmatmul.mubr.bf16.gmra.mrb[0].mxu0 %v222
      %v333 = vpop.f32.mrb[0].mxu0
      %v334 = vadd.f32 %v201, %v333
      %v335 = vpop.f32.mrb[0].mxu0
      %v336 = vpop.f32.mrb[0].mxu0
      %v337 = vadd.f32 %v201, %v336
      %v338 = vpop.f32.mrb[0].mxu0
      %339 = vdwg.mxu0
      %v340 = vadd.f32 %v310, %v313
      %v341 = vadd.f32 %v340, %v318
      %v342 = vadd.f32 %v341, %v321
      %v343 = vadd.f32 %v342, %v326
      %v344 = vadd.f32 %v343, %v329
      %v345 = vadd.f32 %v344, %v334
      %v346 = vadd.f32 %v345, %v337
      %v347 = vrot.slane %v346, 4
      %v348 = vadd.f32 %v346, %v347
      %v349 = vrot.slane %v348, 2
      %v350 = vadd.f32 %v348, %v349
      %v351 = vrot.slane %v350, 1
      %v352 = vadd.f32 %v350, %v351
      %v353 = vrcp.pop 64.0
      %v354 = vmul.f32 %v352, %v353
      %v355 = vsub.f32 %v310, %v354
      %v356 = vsub.f32 %v313, %v354
      %v357 = vsub.f32 %v318, %v354
      %v358 = vsub.f32 %v321, %v354
      %v359 = vsub.f32 %v326, %v354
      %v360 = vsub.f32 %v329, %v354
      %v361 = vsub.f32 %v334, %v354
      %v362 = vsub.f32 %v337, %v354
      %v363 = vmul.f32 %v355, %v355
      %v364 = vmul.f32 %v356, %v356
      %v365 = vmul.f32 %v357, %v357
      %v366 = vmul.f32 %v358, %v358
      %v367 = vmul.f32 %v359, %v359
      %v368 = vmul.f32 %v360, %v360
      %v369 = vmul.f32 %v361, %v361
      %v370 = vmul.f32 %v362, %v362
      %v371 = vadd.f32 %v363, %v364
      %v372 = vadd.f32 %v371, %v365
      %v373 = vadd.f32 %v372, %v366
      %v374 = vadd.f32 %v373, %v367
      %v375 = vadd.f32 %v374, %v368
      %v376 = vadd.f32 %v375, %v369
      %v377 = vadd.f32 %v376, %v370
      %v378 = vrot.slane %v377, 4
      %v379 = vadd.f32 %v377, %v378
      %v380 = vrot.slane %v379, 2
      %v381 = vadd.f32 %v379, %v380
      %v382 = vrot.slane %v381, 1
      %v383 = vadd.f32 %v381, %v382
      %v384 = vmul.f32 %v383, %v353
      %v385 = vadd.f32 %v384, 1e-05
      %v386 = vrsqrt.pop %v385
      %v387 = vmul.f32 %v355, %v386
      %v388 = vmul.f32 %v356, %v386
      %v389 = vmul.f32 %v357, %v386
      %v390 = vmul.f32 %v358, %v386
      %v391 = vmul.f32 %v359, %v386
      %v392 = vmul.f32 %v360, %v386
      %v393 = vmul.f32 %v361, %v386
      %v394 = vmul.f32 %v362, %v386
      %v395 = vmax.f32 %v387, 0.0
      %v396 = vmax.f32 %v388, 0.0
      %v397 = vmax.f32 %v389, 0.0
      %v398 = vmax.f32 %v390, 0.0
      %v399 = vmax.f32 %v391, 0.0
      %v400 = vmax.f32 %v392, 0.0
      %v401 = vmax.f32 %v393, 0.0
      %v402 = vmax.f32 %v394, 0.0
      %403 = vst [vmem:[%s170] sm:$0xff] %v395
      %404 = vst [vmem:[%s170 + $0x8] sm:$0xff] %v396
      %405 = vst [vmem:[%s170 + $0x10] sm:$0xff] %v397
      %406 = vst [vmem:[%s170 + $0x18] sm:$0xff] %v398
      %407 = vst [vmem:[%s170 + $0x20] sm:$0xff] %v399
      %408 = vst [vmem:[%s170 + $0x28] sm:$0xff] %v400
      %409 = vst [vmem:[%s170 + $0x30] sm:$0xff] %v401
      %410 = vst [vmem:[%s170 + $0x38] sm:$0xff] %v402
      %p411 = scmp.lt.s32.totalorder %s14, 1
      %s412 = scalar_select %p411, %s14, 1
      %s413 = smul.addr %s412, 8
      %s414 = smul.addr %s413, 8
      %s415 = scalar_lea.vmem %s3, %s414
      // Predicated region
      $region33: #{conv_block_forward.1} parent=31 // pred_check
        %p416 = pneg %p100
      $region34: #{conv_block_forward.1} parent=31 // pred_check_branch
        %418 = sbr.rel (%p416) target = $region36
      $region35: #{conv_block_forward.1} parent=31 // pred_region
        _
      $region36: #{conv_block_forward.1} parent=31 // pred_fallthru
        _
    $region32: #{conv_block_forward.1} parent=5 // pred_fallthru
      _
    %p419 = scmp.le.s32.totalorder 2, %s9
    // Predicated region
    $region37: #{conv_block_forward.1} parent=5 // pred_check
      %p420 = pneg %p419
    $region38: #{conv_block_forward.1} parent=5 // pred_check_branch
      %422 = sbr.rel (%p420) target = $region40
    $region39: #{conv_block_forward.1} parent=5 // pred_region
      %s423 = ssub.s32 %s9, 2
      // Predicated region
      $region41: #{conv_block_forward.1} parent=39 // pred_check
        %p424 = pneg %p106
      $region42: #{conv_block_forward.1} parent=39 // pred_check_branch
        %426 = sbr.rel (%p424) target = $region44
      $region43: #{conv_block_forward.1} parent=39 // pred_region
        %p427 = scmp.lt.s32.totalorder %s15, 1
        %s428 = scalar_select %p427, %s15, 1
        %s429 = smul.addr %s428, 8
        %s430 = smul.addr %s429, 8
        %s431 = scalar_lea.vmem %s3, %s430
      $region44: #{conv_block_forward.1} parent=39 // pred_fallthru
        _
    $region40: #{conv_block_forward.1} parent=5 // pred_fallthru
      _
  $region6: #{conv_block_forward.1} parent=0 // loop_footer
    %s13 = sadd.s32 1, %s9
  $region7: #{conv_block_forward.1} parent=0 // loop_footer_branch
    %8 = sbr.rel target = $region3
  $region8: #{conv_block_forward.1} parent=0 // loop_exit
    _

</llo_original>
